<compile_context>
chip_gen: v7x
topology: tpu7x:2x2x1
jax: 0.10.0
libtpu: 0.0.40
codegen_flags: <defaults>
</compile_context>

<pallas_src>
import functools

import jax
import jax.numpy as jnp
from jax.experimental import pallas as pl
from jax.experimental.pallas import tpu as pltpu

BN_EPS = 1e-5
SOBEL_X = ((-1.0, 0.0, 1.0), (-2.0, 0.0, 2.0), (-1.0, 0.0, 1.0))
SOBEL_Y = ((-1.0, -2.0, -1.0), (0.0, 0.0, 0.0), (1.0, 2.0, 1.0))


def _sobel_gm_flat(x, H, W):
    """Sobel gradient magnitude of a (C, H*W) tile (rows = flattened HxW planes).

    Separable Sobel (two 3-tap passes per gradient) with zero padding, using
    XLU lane rotations + iota edge masks instead of padded copies / slices.
    """
    C, HW = x.shape
    pos = jax.lax.broadcasted_iota(jnp.int32, (1, HW), 1)
    col = pos % W
    not_left = col != 0                 # x[h, w-1] valid
    not_right = col != (W - 1)          # x[h, w+1] valid
    not_top = pos >= W                  # row h-1 valid
    not_bot = pos < (H - 1) * W         # row h+1 valid

    # column (lane) pass: neighbors along w are flat shifts by +/-1
    xl = jnp.where(not_left, pltpu.roll(x, shift=1, axis=1), 0.0)
    xr = jnp.where(not_right, pltpu.roll(x, shift=HW - 1, axis=1), 0.0)
    cx = xr - xl                 # [-1, 0, 1]
    sx = xl + 2.0 * x + xr       # [ 1, 2, 1]

    # row pass: neighbors along h are flat shifts by +/-W
    cx_up = jnp.where(not_top, pltpu.roll(cx, shift=W, axis=1), 0.0)
    cx_dn = jnp.where(not_bot, pltpu.roll(cx, shift=HW - W, axis=1), 0.0)
    sx_up = jnp.where(not_top, pltpu.roll(sx, shift=W, axis=1), 0.0)
    sx_dn = jnp.where(not_bot, pltpu.roll(sx, shift=HW - W, axis=1), 0.0)

    gx = cx_up + 2.0 * cx + cx_dn
    gy = sx_dn - sx_up
    return jnp.sqrt(gx * gx + gy * gy)


def _affine_vpu(w, b, x):
    """w @ x + b (w:(C,C), b:(C,1), x:(C,HW)) as exact-f32 broadcast MACs."""
    C = x.shape[0]
    acc = b
    for c in range(C):
        acc = acc + w[:, c:c + 1] * x[c:c + 1, :]
    return acc


def _affine_mxu(w, b, x):
    """Same affine on the MXU; preferred for larger channel counts."""
    return jnp.dot(w, x, preferred_element_type=jnp.float32) + b


def _pmm_stats_kernel(x_ref, sum_ref, sq_ref, *, H, W):
    # Phase 1: per-(batch, channel) partial sum / sum-of-squares of gm.
    x = x_ref[...].astype(jnp.float32)          # (C, H*W)
    gm = _sobel_gm_flat(x, H, W)
    sum_ref[...] = jnp.sum(gm, axis=1, keepdims=True)
    sq_ref[...] = jnp.sum(gm * gm, axis=1, keepdims=True)


def _pmm_main_kernel(wa_ref, wb_ref, ba_ref, bb_ref, abn_ref, bbn_ref,
                     x_ref, out_ref, *, H, W):
    # Phase 2: recompute gm, apply folded BN affine and membership epilogue.
    x = x_ref[...].astype(jnp.float32)          # (C, H*W)
    C = x.shape[0]
    gm = _sobel_gm_flat(x, H, W)

    affine = _affine_mxu if C >= 16 else _affine_vpu
    # relu(gamma*(V - x)) and relu(gamma*(x - W)); gamma, the identity and the
    # conv biases are already folded into (wa, ba) / (wb, bb) by the wrapper.
    r1 = jnp.maximum(affine(wa_ref[...], ba_ref[...], x), 0.0)
    r2 = jnp.maximum(affine(wb_ref[...], bb_ref[...], x), 0.0)

    # gradient_weight = 1 + gs * BN(gm)  ==  a + b * gm   (per channel)
    delta = (abn_ref[...] + bbn_ref[...] * gm) * jnp.maximum(r1, r2)
    out_ref[...] = (1.0 - delta).astype(out_ref.dtype)


def pmm_forward(x, wv, bv, ww, bw, gamma, grad_scale):
    """x: (N, C, H, W) NCHW; wv/ww: (C, C) 1x1-conv weights; bv/bw: (C,) biases."""
    N, C, H, W = x.shape
    assert wv.shape == (C, C) and ww.shape == (C, C), \
        "module semantics require out_channels == in_channels"
    HW = H * W
    # TODO(synk): for very large C*H*W planes add spatial sub-tiling with a
    # 1-row halo; currently one (C, H*W) plane-set per grid step must fit VMEM.
    xr = x.reshape(N, C, HW)

    block_bytes = C * HW * 4
    # Explicit VMEM budget: enough for double-buffered in/out + live f32
    # temporaries, capped at 32 MiB so it is safe on v7x (64 MiB physical) and
    # still a useful bump over v5e's 16 MiB default.
    vmem_limit = int(min(32 << 20, max(16 << 20, 24 * block_bytes)))
    cparams = pltpu.CompilerParams(
        dimension_semantics=("parallel",),      # batch tiles -> both v7x TCs
        vmem_limit_bytes=vmem_limit,
    )

    # ---------------- phase 1: per-channel sum / sumsq of gm ----------------
    psum, psq = pl.pallas_call(
        functools.partial(_pmm_stats_kernel, H=H, W=W),
        grid=(N,),
        in_specs=[pl.BlockSpec((None, C, HW), lambda n: (n, 0, 0))],
        out_specs=(pl.BlockSpec((None, C, 1), lambda n: (n, 0, 0)),
                   pl.BlockSpec((None, C, 1), lambda n: (n, 0, 0))),
        out_shape=(jax.ShapeDtypeStruct((N, C, 1), jnp.float32),
                   jax.ShapeDtypeStruct((N, C, 1), jnp.float32)),
        compiler_params=cparams,
    )(xr)

    # BatchNorm2d training-mode stats (biased variance), single pass + clamp.
    cnt = float(N * HW)
    mean = jnp.sum(psum[:, :, 0], axis=0) / cnt                # (C,)
    ex2 = jnp.sum(psq[:, :, 0], axis=0) / cnt
    var = jnp.maximum(ex2 - mean * mean, 0.0)
    inv_std = jax.lax.rsqrt(var + BN_EPS)

    # Fold BN + learnable_gradient_scale:  1 + gs*(gm-mean)*inv_std = a + b*gm
    b_bn = (grad_scale * inv_std).astype(jnp.float32)          # (C,)
    a_bn = (1.0 - b_bn * mean).astype(jnp.float32)

    # Fold gamma, the identity and conv biases into the 1x1 affine maps:
    #   gamma*(V - x) = (gamma*(Wv - I)) @ x + gamma*bv
    #   gamma*(x - W) = (gamma*(I - Ww)) @ x - gamma*bw
    eye = jnp.eye(C, dtype=jnp.float32)
    wa = gamma * (wv.astype(jnp.float32) - eye)
    ba = (gamma * bv.astype(jnp.float32)).reshape(C, 1)
    wb = gamma * (eye - ww.astype(jnp.float32))
    bb = (-gamma * bw.astype(jnp.float32)).reshape(C, 1)

    # ---------------- phase 2: fused membership epilogue ----------------
    const2 = lambda n: (0, 0)
    out = pl.pallas_call(
        functools.partial(_pmm_main_kernel, H=H, W=W),
        grid=(N,),
        in_specs=[
            pl.BlockSpec((C, C), const2),                       # wa
            pl.BlockSpec((C, C), const2),                       # wb
            pl.BlockSpec((C, 1), const2),                       # ba
            pl.BlockSpec((C, 1), const2),                       # bb
            pl.BlockSpec((C, 1), const2),                       # a_bn
            pl.BlockSpec((C, 1), const2),                       # b_bn
            pl.BlockSpec((None, C, HW), lambda n: (n, 0, 0)),   # x tile
        ],
        out_specs=pl.BlockSpec((None, C, HW), lambda n: (n, 0, 0)),
        out_shape=jax.ShapeDtypeStruct((N, C, HW), x.dtype),
        compiler_params=cparams,
    )(wa, wb, ba, bb, a_bn.reshape(C, 1), b_bn.reshape(C, 1), xr)
    return out.reshape(N, C, H, W)


def pmm_reference(x, wv, bv, ww, bw, gamma, grad_scale):
    """Pure-JAX reference mirroring the PyTorch module (training-mode BN)."""
    N, C, H, W = x.shape
    hp = jax.lax.Precision.HIGHEST
    V = jnp.einsum('nchw,oc->nohw', x, wv, precision=hp) + bv[None, :, None, None]
    Wm = jnp.einsum('nchw,oc->nohw', x, ww, precision=hp) + bw[None, :, None, None]
    kx = jnp.tile(jnp.asarray(SOBEL_X, jnp.float32)[None, None], (C, 1, 1, 1))
    ky = jnp.tile(jnp.asarray(SOBEL_Y, jnp.float32)[None, None], (C, 1, 1, 1))
    dn = ('NCHW', 'OIHW', 'NCHW')
    gx = jax.lax.conv_general_dilated(x, kx, (1, 1), ((1, 1), (1, 1)),
                                      dimension_numbers=dn,
                                      feature_group_count=C, precision=hp)
    gy = jax.lax.conv_general_dilated(x, ky, (1, 1), ((1, 1), (1, 1)),
                                      dimension_numbers=dn,
                                      feature_group_count=C, precision=hp)
    gm = jnp.sqrt(gx ** 2 + gy ** 2)
    mean = jnp.mean(gm, axis=(0, 2, 3), keepdims=True)
    var = jnp.mean((gm - mean) ** 2, axis=(0, 2, 3), keepdims=True)
    gm_n = (gm - mean) / jnp.sqrt(var + BN_EPS)
    gw = 1.0 + grad_scale * gm_n
    delta = gw * jnp.maximum(jax.nn.relu(gamma * (V - x)),
                             jax.nn.relu(gamma * (x - Wm)))
    return 1.0 - delta


if __name__ == "__main__":
    # Small shapes consistent with the module (out_channels == in_channels so
    # V - x / x - W broadcast exactly as in the PyTorch forward).
    N, C, H, W = 2, 4, 16, 16
    gamma = 1.0                 # nn.Parameter(torch.tensor(1.0))
    grad_scale = 0.5            # nn.Parameter(torch.tensor(0.5))

    key = jax.random.PRNGKey(0)
    kx_, kwv, kbv, kww, kbw = jax.random.split(key, 5)
    bound = 1.0 / jnp.sqrt(float(C))  # mimics Conv2d default init scale
    x = jax.random.normal(kx_, (N, C, H, W), jnp.float32)
    wv = jax.random.uniform(kwv, (C, C), jnp.float32, -bound, bound)  # conv_V weight (O, C)
    bv = jax.random.uniform(kbv, (C,), jnp.float32, -bound, bound)    # conv_V bias
    ww = jax.random.uniform(kww, (C, C), jnp.float32, -bound, bound)  # conv_W weight
    bw = jax.random.uniform(kbw, (C,), jnp.float32, -bound, bound)    # conv_W bias

    out = jax.jit(pmm_forward)(x, wv, bv, ww, bw, gamma, grad_scale)
    out = jax.block_until_ready(out)

    ref = pmm_reference(x, wv, bv, ww, bw, gamma, grad_scale)
    max_err = float(jnp.max(jnp.abs(out - ref)))
    assert out.shape == (N, C, H, W) and out.dtype == jnp.float32
    assert max_err < 1e-3, f"kernel/reference mismatch: max abs err = {max_err}"

    print("KERNEL_OK")
</pallas_src>

<mosaic_0001>
module attributes {stable_mosaic.version = 11 : i64} {
  func.func @_pmm_stats_kernel(%arg0: i32, %arg1: memref<1x4x256xf32, #tpu.memory_space<vmem>>, %arg2: memref<1x4x1xf32, #tpu.memory_space<vmem>>, %arg3: memref<1x4x1xf32, #tpu.memory_space<vmem>>) attributes {dimension_semantics = [#tpu.dimension_semantics<parallel>], iteration_bounds = array<i64: 2>, scalar_prefetch = 0 : i64, scratch_operands = 0 : i64, tpu.core_type = #tpu.core_type<tc>, window_params = [{transform_indices = @transform_0, window_bounds = array<i64: 1, 4, 256>}, {transform_indices = @transform_1, window_bounds = array<i64: 1, 4, 1>}, {transform_indices = @transform_2, window_bounds = array<i64: 1, 4, 1>}]} {
    %c0 = arith.constant 0 : index
    %c0_0 = arith.constant 0 : index
    %c0_1 = arith.constant 0 : index
    %0 = vector.load %arg1[%c0, %c0_0, %c0_1] : memref<1x4x256xf32, #tpu.memory_space<vmem>>, vector<1x4x256xf32>
    %1 = vector.shape_cast %0 : vector<1x4x256xf32> to vector<4x256xf32>
    %2 = tpu.iota {dimensions = array<i32: 1>} : vector<1x256xi32>
    %c16_i32 = arith.constant 16 : i32
    %c0_i32 = arith.constant 0 : i32
    %3 = arith.cmpi eq, %c16_i32, %c0_i32 : i32
    %c1_i32 = arith.constant 1 : i32
    %4 = arith.select %3, %c1_i32, %c16_i32 : i32
    %5 = vector.broadcast %4 : i32 to vector<1x256xi32>
    %6 = arith.remsi %2, %5 : vector<1x256xi32>
    %c0_i32_2 = arith.constant 0 : i32
    %7 = vector.broadcast %c0_i32_2 : i32 to vector<1x256xi32>
    %8 = arith.cmpi ne, %6, %7 : vector<1x256xi32>
    %c0_i32_3 = arith.constant 0 : i32
    %9 = vector.broadcast %c0_i32_3 : i32 to vector<1x256xi32>
    %10 = arith.cmpi slt, %6, %9 : vector<1x256xi32>
    %c0_i32_4 = arith.constant 0 : i32
    %11 = arith.cmpi slt, %4, %c0_i32_4 : i32
    %12 = vector.broadcast %11 : i1 to vector<1x256xi1>
    %13 = vector.broadcast %12 : vector<1x256xi1> to vector<1x256xi1>
    %14 = arith.xori %10, %13 : vector<1x256xi1>
    %15 = arith.andi %14, %8 : vector<1x256xi1>
    %16 = vector.broadcast %4 : i32 to vector<1x256xi32>
    %17 = arith.addi %6, %16 : vector<1x256xi32>
    %18 = arith.select %15, %17, %6 : vector<1x256xi1>, vector<1x256xi32>
    %c0_i32_5 = arith.constant 0 : i32
    %19 = vector.broadcast %c0_i32_5 : i32 to vector<1x256xi32>
    %20 = arith.cmpi ne, %18, %19 : vector<1x256xi32>
    %c15_i32 = arith.constant 15 : i32
    %21 = vector.broadcast %c15_i32 : i32 to vector<1x256xi32>
    %22 = arith.cmpi ne, %18, %21 : vector<1x256xi32>
    %c16_i32_6 = arith.constant 16 : i32
    %23 = vector.broadcast %c16_i32_6 : i32 to vector<1x256xi32>
    %24 = arith.cmpi sge, %2, %23 : vector<1x256xi32>
    %c240_i32 = arith.constant 240 : i32
    %25 = vector.broadcast %c240_i32 : i32 to vector<1x256xi32>
    %26 = arith.cmpi slt, %2, %25 : vector<1x256xi32>
    %c1_i32_7 = arith.constant 1 : i32
    %27 = tpu.dynamic_rotate %1 by %c1_i32_7 dim 1 : vector<4x256xf32>, i32 -> vector<4x256xf32>
    %cst = arith.constant 0.000000e+00 : f32
    %28 = vector.shape_cast %20 : vector<1x256xi1> to vector<1x256xi1>
    %29 = vector.broadcast %28 : vector<1x256xi1> to vector<4x256xi1>
    %30 = vector.broadcast %cst : f32 to vector<4x256xf32>
    %31 = arith.select %29, %27, %30 : vector<4x256xi1>, vector<4x256xf32>
    %c255_i32 = arith.constant 255 : i32
    %32 = tpu.dynamic_rotate %1 by %c255_i32 dim 1 : vector<4x256xf32>, i32 -> vector<4x256xf32>
    %cst_8 = arith.constant 0.000000e+00 : f32
    %33 = vector.shape_cast %22 : vector<1x256xi1> to vector<1x256xi1>
    %34 = vector.broadcast %33 : vector<1x256xi1> to vector<4x256xi1>
    %35 = vector.broadcast %cst_8 : f32 to vector<4x256xf32>
    %36 = arith.select %34, %32, %35 : vector<4x256xi1>, vector<4x256xf32>
    %37 = arith.subf %36, %31 : vector<4x256xf32>
    %cst_9 = arith.constant 2.000000e+00 : f32
    %38 = vector.broadcast %cst_9 : f32 to vector<4x256xf32>
    %39 = arith.mulf %38, %1 : vector<4x256xf32>
    %40 = arith.addf %31, %39 : vector<4x256xf32>
    %41 = arith.addf %40, %36 : vector<4x256xf32>
    %c16_i32_10 = arith.constant 16 : i32
    %42 = tpu.dynamic_rotate %37 by %c16_i32_10 dim 1 : vector<4x256xf32>, i32 -> vector<4x256xf32>
    %cst_11 = arith.constant 0.000000e+00 : f32
    %43 = vector.shape_cast %24 : vector<1x256xi1> to vector<1x256xi1>
    %44 = vector.broadcast %43 : vector<1x256xi1> to vector<4x256xi1>
    %45 = vector.broadcast %cst_11 : f32 to vector<4x256xf32>
    %46 = arith.select %44, %42, %45 : vector<4x256xi1>, vector<4x256xf32>
    %c240_i32_12 = arith.constant 240 : i32
    %47 = tpu.dynamic_rotate %37 by %c240_i32_12 dim 1 : vector<4x256xf32>, i32 -> vector<4x256xf32>
    %cst_13 = arith.constant 0.000000e+00 : f32
    %48 = vector.shape_cast %26 : vector<1x256xi1> to vector<1x256xi1>
    %49 = vector.broadcast %48 : vector<1x256xi1> to vector<4x256xi1>
    %50 = vector.broadcast %cst_13 : f32 to vector<4x256xf32>
    %51 = arith.select %49, %47, %50 : vector<4x256xi1>, vector<4x256xf32>
    %c16_i32_14 = arith.constant 16 : i32
    %52 = tpu.dynamic_rotate %41 by %c16_i32_14 dim 1 : vector<4x256xf32>, i32 -> vector<4x256xf32>
    %cst_15 = arith.constant 0.000000e+00 : f32
    %53 = vector.shape_cast %24 : vector<1x256xi1> to vector<1x256xi1>
    %54 = vector.broadcast %53 : vector<1x256xi1> to vector<4x256xi1>
    %55 = vector.broadcast %cst_15 : f32 to vector<4x256xf32>
    %56 = arith.select %54, %52, %55 : vector<4x256xi1>, vector<4x256xf32>
    %c240_i32_16 = arith.constant 240 : i32
    %57 = tpu.dynamic_rotate %41 by %c240_i32_16 dim 1 : vector<4x256xf32>, i32 -> vector<4x256xf32>
    %cst_17 = arith.constant 0.000000e+00 : f32
    %58 = vector.shape_cast %26 : vector<1x256xi1> to vector<1x256xi1>
    %59 = vector.broadcast %58 : vector<1x256xi1> to vector<4x256xi1>
    %60 = vector.broadcast %cst_17 : f32 to vector<4x256xf32>
    %61 = arith.select %59, %57, %60 : vector<4x256xi1>, vector<4x256xf32>
    %cst_18 = arith.constant 2.000000e+00 : f32
    %62 = vector.broadcast %cst_18 : f32 to vector<4x256xf32>
    %63 = arith.mulf %62, %37 : vector<4x256xf32>
    %64 = arith.addf %46, %63 : vector<4x256xf32>
    %65 = arith.addf %64, %51 : vector<4x256xf32>
    %66 = arith.subf %61, %56 : vector<4x256xf32>
    %67 = arith.mulf %65, %65 : vector<4x256xf32>
    %68 = arith.mulf %66, %66 : vector<4x256xf32>
    %69 = arith.addf %67, %68 : vector<4x256xf32>
    %70 = math.sqrt %69 : vector<4x256xf32>
    %cst_19 = arith.constant dense<0.000000e+00> : vector<4xf32>
    %71 = vector.multi_reduction <add>, %70, %cst_19 [1] : vector<4x256xf32> to vector<4xf32>
    %72 = vector.shape_cast %71 : vector<4xf32> to vector<4x1xf32>
    %c0_20 = arith.constant 0 : index
    %c0_21 = arith.constant 0 : index
    %c0_22 = arith.constant 0 : index
    %73 = vector.load %arg2[%c0_20, %c0_21, %c0_22] : memref<1x4x1xf32, #tpu.memory_space<vmem>>, vector<1x4x1xf32>
    %74 = vector.shape_cast %73 : vector<1x4x1xf32> to vector<4x1xf32>
    %75 = vector.shape_cast %72 : vector<4x1xf32> to vector<1x4x1xf32>
    tpu.vector_store %arg2[%c0_20, %c0_21, %c0_22], %75 {strides = array<i32>} : memref<1x4x1xf32, #tpu.memory_space<vmem>>, vector<1x4x1xf32>,
    %76 = arith.mulf %70, %70 : vector<4x256xf32>
    %cst_23 = arith.constant dense<0.000000e+00> : vector<4xf32>
    %77 = vector.multi_reduction <add>, %76, %cst_23 [1] : vector<4x256xf32> to vector<4xf32>
    %78 = vector.shape_cast %77 : vector<4xf32> to vector<4x1xf32>
    %c0_24 = arith.constant 0 : index
    %c0_25 = arith.constant 0 : index
    %c0_26 = arith.constant 0 : index
    %79 = vector.load %arg3[%c0_24, %c0_25, %c0_26] : memref<1x4x1xf32, #tpu.memory_space<vmem>>, vector<1x4x1xf32>
    %80 = vector.shape_cast %79 : vector<1x4x1xf32> to vector<4x1xf32>
    %81 = vector.shape_cast %78 : vector<4x1xf32> to vector<1x4x1xf32>
    tpu.vector_store %arg3[%c0_24, %c0_25, %c0_26], %81 {strides = array<i32>} : memref<1x4x1xf32, #tpu.memory_space<vmem>>, vector<1x4x1xf32>,
    return
  }
  func.func @transform_0(%arg0: i32) -> (i32, i32, i32) {
    %c0_i32 = arith.constant 0 : i32
    %c0_i32_0 = arith.constant 0 : i32
    %c0_i32_1 = arith.constant 0 : i32
    return %arg0, %c0_i32, %c0_i32_0 : i32, i32, i32
  }
  func.func @transform_1(%arg0: i32) -> (i32, i32, i32) {
    %c0_i32 = arith.constant 0 : i32
    %c0_i32_0 = arith.constant 0 : i32
    %c0_i32_1 = arith.constant 0 : i32
    return %arg0, %c0_i32, %c0_i32_0 : i32, i32, i32
  }
  func.func @transform_2(%arg0: i32) -> (i32, i32, i32) {
    %c0_i32 = arith.constant 0 : i32
    %c0_i32_0 = arith.constant 0 : i32
    %c0_i32_1 = arith.constant 0 : i32
    return %arg0, %c0_i32, %c0_i32_0 : i32, i32, i32
  }
}

module attributes {stable_mosaic.version = 11 : i64} {
  func.func @_pmm_main_kernel(%arg0: i32, %arg1: memref<4x4xf32, #tpu.memory_space<vmem>>, %arg2: memref<4x4xf32, #tpu.memory_space<vmem>>, %arg3: memref<4x1xf32, #tpu.memory_space<vmem>>, %arg4: memref<4x1xf32, #tpu.memory_space<vmem>>, %arg5: memref<4x1xf32, #tpu.memory_space<vmem>>, %arg6: memref<4x1xf32, #tpu.memory_space<vmem>>, %arg7: memref<1x4x256xf32, #tpu.memory_space<vmem>>, %arg8: memref<1x4x256xf32, #tpu.memory_space<vmem>>) attributes {dimension_semantics = [#tpu.dimension_semantics<parallel>], iteration_bounds = array<i64: 2>, scalar_prefetch = 0 : i64, scratch_operands = 0 : i64, tpu.core_type = #tpu.core_type<tc>, window_params = [{pipeline_mode = #tpu.pipeline_mode<synchronous>, transform_indices = @transform_0, window_bounds = array<i64: 4, 4>}, {pipeline_mode = #tpu.pipeline_mode<synchronous>, transform_indices = @transform_1, window_bounds = array<i64: 4, 4>}, {pipeline_mode = #tpu.pipeline_mode<synchronous>, transform_indices = @transform_2, window_bounds = array<i64: 4, 1>}, {pipeline_mode = #tpu.pipeline_mode<synchronous>, transform_indices = @transform_3, window_bounds = array<i64: 4, 1>}, {pipeline_mode = #tpu.pipeline_mode<synchronous>, transform_indices = @transform_4, window_bounds = array<i64: 4, 1>}, {pipeline_mode = #tpu.pipeline_mode<synchronous>, transform_indices = @transform_5, window_bounds = array<i64: 4, 1>}, {transform_indices = @transform_6, window_bounds = array<i64: 1, 4, 256>}, {transform_indices = @transform_7, window_bounds = array<i64: 1, 4, 256>}]} {
    %c0 = arith.constant 0 : index
    %c0_0 = arith.constant 0 : index
    %c0_1 = arith.constant 0 : index
    %0 = vector.load %arg7[%c0, %c0_0, %c0_1] : memref<1x4x256xf32, #tpu.memory_space<vmem>>, vector<1x4x256xf32>
    %1 = vector.shape_cast %0 : vector<1x4x256xf32> to vector<4x256xf32>
    %2 = tpu.iota {dimensions = array<i32: 1>} : vector<1x256xi32>
    %c16_i32 = arith.constant 16 : i32
    %c0_i32 = arith.constant 0 : i32
    %3 = arith.cmpi eq, %c16_i32, %c0_i32 : i32
    %c1_i32 = arith.constant 1 : i32
    %4 = arith.select %3, %c1_i32, %c16_i32 : i32
    %5 = vector.broadcast %4 : i32 to vector<1x256xi32>
    %6 = arith.remsi %2, %5 : vector<1x256xi32>
    %c0_i32_2 = arith.constant 0 : i32
    %7 = vector.broadcast %c0_i32_2 : i32 to vector<1x256xi32>
    %8 = arith.cmpi ne, %6, %7 : vector<1x256xi32>
    %c0_i32_3 = arith.constant 0 : i32
    %9 = vector.broadcast %c0_i32_3 : i32 to vector<1x256xi32>
    %10 = arith.cmpi slt, %6, %9 : vector<1x256xi32>
    %c0_i32_4 = arith.constant 0 : i32
    %11 = arith.cmpi slt, %4, %c0_i32_4 : i32
    %12 = vector.broadcast %11 : i1 to vector<1x256xi1>
    %13 = vector.broadcast %12 : vector<1x256xi1> to vector<1x256xi1>
    %14 = arith.xori %10, %13 : vector<1x256xi1>
    %15 = arith.andi %14, %8 : vector<1x256xi1>
    %16 = vector.broadcast %4 : i32 to vector<1x256xi32>
    %17 = arith.addi %6, %16 : vector<1x256xi32>
    %18 = arith.select %15, %17, %6 : vector<1x256xi1>, vector<1x256xi32>
    %c0_i32_5 = arith.constant 0 : i32
    %19 = vector.broadcast %c0_i32_5 : i32 to vector<1x256xi32>
    %20 = arith.cmpi ne, %18, %19 : vector<1x256xi32>
    %c15_i32 = arith.constant 15 : i32
    %21 = vector.broadcast %c15_i32 : i32 to vector<1x256xi32>
    %22 = arith.cmpi ne, %18, %21 : vector<1x256xi32>
    %c16_i32_6 = arith.constant 16 : i32
    %23 = vector.broadcast %c16_i32_6 : i32 to vector<1x256xi32>
    %24 = arith.cmpi sge, %2, %23 : vector<1x256xi32>
    %c240_i32 = arith.constant 240 : i32
    %25 = vector.broadcast %c240_i32 : i32 to vector<1x256xi32>
    %26 = arith.cmpi slt, %2, %25 : vector<1x256xi32>
    %c1_i32_7 = arith.constant 1 : i32
    %27 = tpu.dynamic_rotate %1 by %c1_i32_7 dim 1 : vector<4x256xf32>, i32 -> vector<4x256xf32>
    %cst = arith.constant 0.000000e+00 : f32
    %28 = vector.shape_cast %20 : vector<1x256xi1> to vector<1x256xi1>
    %29 = vector.broadcast %28 : vector<1x256xi1> to vector<4x256xi1>
    %30 = vector.broadcast %cst : f32 to vector<4x256xf32>
    %31 = arith.select %29, %27, %30 : vector<4x256xi1>, vector<4x256xf32>
    %c255_i32 = arith.constant 255 : i32
    %32 = tpu.dynamic_rotate %1 by %c255_i32 dim 1 : vector<4x256xf32>, i32 -> vector<4x256xf32>
    %cst_8 = arith.constant 0.000000e+00 : f32
    %33 = vector.shape_cast %22 : vector<1x256xi1> to vector<1x256xi1>
    %34 = vector.broadcast %33 : vector<1x256xi1> to vector<4x256xi1>
    %35 = vector.broadcast %cst_8 : f32 to vector<4x256xf32>
    %36 = arith.select %34, %32, %35 : vector<4x256xi1>, vector<4x256xf32>
    %37 = arith.subf %36, %31 : vector<4x256xf32>
    %cst_9 = arith.constant 2.000000e+00 : f32
    %38 = vector.broadcast %cst_9 : f32 to vector<4x256xf32>
    %39 = arith.mulf %38, %1 : vector<4x256xf32>
    %40 = arith.addf %31, %39 : vector<4x256xf32>
    %41 = arith.addf %40, %36 : vector<4x256xf32>
    %c16_i32_10 = arith.constant 16 : i32
    %42 = tpu.dynamic_rotate %37 by %c16_i32_10 dim 1 : vector<4x256xf32>, i32 -> vector<4x256xf32>
    %cst_11 = arith.constant 0.000000e+00 : f32
    %43 = vector.shape_cast %24 : vector<1x256xi1> to vector<1x256xi1>
    %44 = vector.broadcast %43 : vector<1x256xi1> to vector<4x256xi1>
    %45 = vector.broadcast %cst_11 : f32 to vector<4x256xf32>
    %46 = arith.select %44, %42, %45 : vector<4x256xi1>, vector<4x256xf32>
    %c240_i32_12 = arith.constant 240 : i32
    %47 = tpu.dynamic_rotate %37 by %c240_i32_12 dim 1 : vector<4x256xf32>, i32 -> vector<4x256xf32>
    %cst_13 = arith.constant 0.000000e+00 : f32
    %48 = vector.shape_cast %26 : vector<1x256xi1> to vector<1x256xi1>
    %49 = vector.broadcast %48 : vector<1x256xi1> to vector<4x256xi1>
    %50 = vector.broadcast %cst_13 : f32 to vector<4x256xf32>
    %51 = arith.select %49, %47, %50 : vector<4x256xi1>, vector<4x256xf32>
    %c16_i32_14 = arith.constant 16 : i32
    %52 = tpu.dynamic_rotate %41 by %c16_i32_14 dim 1 : vector<4x256xf32>, i32 -> vector<4x256xf32>
    %cst_15 = arith.constant 0.000000e+00 : f32
    %53 = vector.shape_cast %24 : vector<1x256xi1> to vector<1x256xi1>
    %54 = vector.broadcast %53 : vector<1x256xi1> to vector<4x256xi1>
    %55 = vector.broadcast %cst_15 : f32 to vector<4x256xf32>
    %56 = arith.select %54, %52, %55 : vector<4x256xi1>, vector<4x256xf32>
    %c240_i32_16 = arith.constant 240 : i32
    %57 = tpu.dynamic_rotate %41 by %c240_i32_16 dim 1 : vector<4x256xf32>, i32 -> vector<4x256xf32>
    %cst_17 = arith.constant 0.000000e+00 : f32
    %58 = vector.shape_cast %26 : vector<1x256xi1> to vector<1x256xi1>
    %59 = vector.broadcast %58 : vector<1x256xi1> to vector<4x256xi1>
    %60 = vector.broadcast %cst_17 : f32 to vector<4x256xf32>
    %61 = arith.select %59, %57, %60 : vector<4x256xi1>, vector<4x256xf32>
    %cst_18 = arith.constant 2.000000e+00 : f32
    %62 = vector.broadcast %cst_18 : f32 to vector<4x256xf32>
    %63 = arith.mulf %62, %37 : vector<4x256xf32>
    %64 = arith.addf %46, %63 : vector<4x256xf32>
    %65 = arith.addf %64, %51 : vector<4x256xf32>
    %66 = arith.subf %61, %56 : vector<4x256xf32>
    %67 = arith.mulf %65, %65 : vector<4x256xf32>
    %68 = arith.mulf %66, %66 : vector<4x256xf32>
    %69 = arith.addf %67, %68 : vector<4x256xf32>
    %70 = math.sqrt %69 : vector<4x256xf32>
    %c0_19 = arith.constant 0 : index
    %c0_20 = arith.constant 0 : index
    %71 = vector.load %arg1[%c0_19, %c0_20] : memref<4x4xf32, #tpu.memory_space<vmem>>, vector<4x4xf32>
    %c0_21 = arith.constant 0 : index
    %c0_22 = arith.constant 0 : index
    %72 = vector.load %arg3[%c0_21, %c0_22] : memref<4x1xf32, #tpu.memory_space<vmem>>, vector<4x1xf32>
    %73 = vector.extract_strided_slice %71 {offsets = [0, 0], sizes = [4, 1], strides = [1, 1]} : vector<4x4xf32> to vector<4x1xf32>
    %74 = vector.extract_strided_slice %1 {offsets = [0, 0], sizes = [1, 256], strides = [1, 1]} : vector<4x256xf32> to vector<1x256xf32>
    %75 = vector.broadcast %73 : vector<4x1xf32> to vector<4x256xf32>
    %76 = vector.broadcast %74 : vector<1x256xf32> to vector<4x256xf32>
    %77 = arith.mulf %75, %76 : vector<4x256xf32>
    %78 = vector.broadcast %72 : vector<4x1xf32> to vector<4x256xf32>
    %79 = arith.addf %78, %77 : vector<4x256xf32>
    %80 = vector.extract_strided_slice %71 {offsets = [0, 1], sizes = [4, 1], strides = [1, 1]} : vector<4x4xf32> to vector<4x1xf32>
    %81 = vector.extract_strided_slice %1 {offsets = [1, 0], sizes = [1, 256], strides = [1, 1]} : vector<4x256xf32> to vector<1x256xf32>
    %82 = vector.broadcast %80 : vector<4x1xf32> to vector<4x256xf32>
    %83 = vector.broadcast %81 : vector<1x256xf32> to vector<4x256xf32>
    %84 = arith.mulf %82, %83 : vector<4x256xf32>
    %85 = arith.addf %79, %84 : vector<4x256xf32>
    %86 = vector.extract_strided_slice %71 {offsets = [0, 2], sizes = [4, 1], strides = [1, 1]} : vector<4x4xf32> to vector<4x1xf32>
    %87 = vector.extract_strided_slice %1 {offsets = [2, 0], sizes = [1, 256], strides = [1, 1]} : vector<4x256xf32> to vector<1x256xf32>
    %88 = vector.broadcast %86 : vector<4x1xf32> to vector<4x256xf32>
    %89 = vector.broadcast %87 : vector<1x256xf32> to vector<4x256xf32>
    %90 = arith.mulf %88, %89 : vector<4x256xf32>
    %91 = arith.addf %85, %90 : vector<4x256xf32>
    %92 = vector.extract_strided_slice %71 {offsets = [0, 3], sizes = [4, 1], strides = [1, 1]} : vector<4x4xf32> to vector<4x1xf32>
    %93 = vector.extract_strided_slice %1 {offsets = [3, 0], sizes = [1, 256], strides = [1, 1]} : vector<4x256xf32> to vector<1x256xf32>
    %94 = vector.broadcast %92 : vector<4x1xf32> to vector<4x256xf32>
    %95 = vector.broadcast %93 : vector<1x256xf32> to vector<4x256xf32>
    %96 = arith.mulf %94, %95 : vector<4x256xf32>
    %97 = arith.addf %91, %96 : vector<4x256xf32>
    %cst_23 = arith.constant 0.000000e+00 : f32
    %98 = vector.broadcast %cst_23 : f32 to vector<4x256xf32>
    %99 = arith.maximumf %97, %98 : vector<4x256xf32>
    %c0_24 = arith.constant 0 : index
    %c0_25 = arith.constant 0 : index
    %100 = vector.load %arg2[%c0_24, %c0_25] : memref<4x4xf32, #tpu.memory_space<vmem>>, vector<4x4xf32>
    %c0_26 = arith.constant 0 : index
    %c0_27 = arith.constant 0 : index
    %101 = vector.load %arg4[%c0_26, %c0_27] : memref<4x1xf32, #tpu.memory_space<vmem>>, vector<4x1xf32>
    %102 = vector.extract_strided_slice %100 {offsets = [0, 0], sizes = [4, 1], strides = [1, 1]} : vector<4x4xf32> to vector<4x1xf32>
    %103 = vector.extract_strided_slice %1 {offsets = [0, 0], sizes = [1, 256], strides = [1, 1]} : vector<4x256xf32> to vector<1x256xf32>
    %104 = vector.broadcast %102 : vector<4x1xf32> to vector<4x256xf32>
    %105 = vector.broadcast %103 : vector<1x256xf32> to vector<4x256xf32>
    %106 = arith.mulf %104, %105 : vector<4x256xf32>
    %107 = vector.broadcast %101 : vector<4x1xf32> to vector<4x256xf32>
    %108 = arith.addf %107, %106 : vector<4x256xf32>
    %109 = vector.extract_strided_slice %100 {offsets = [0, 1], sizes = [4, 1], strides = [1, 1]} : vector<4x4xf32> to vector<4x1xf32>
    %110 = vector.extract_strided_slice %1 {offsets = [1, 0], sizes = [1, 256], strides = [1, 1]} : vector<4x256xf32> to vector<1x256xf32>
    %111 = vector.broadcast %109 : vector<4x1xf32> to vector<4x256xf32>
    %112 = vector.broadcast %110 : vector<1x256xf32> to vector<4x256xf32>
    %113 = arith.mulf %111, %112 : vector<4x256xf32>
    %114 = arith.addf %108, %113 : vector<4x256xf32>
    %115 = vector.extract_strided_slice %100 {offsets = [0, 2], sizes = [4, 1], strides = [1, 1]} : vector<4x4xf32> to vector<4x1xf32>
    %116 = vector.extract_strided_slice %1 {offsets = [2, 0], sizes = [1, 256], strides = [1, 1]} : vector<4x256xf32> to vector<1x256xf32>
    %117 = vector.broadcast %115 : vector<4x1xf32> to vector<4x256xf32>
    %118 = vector.broadcast %116 : vector<1x256xf32> to vector<4x256xf32>
    %119 = arith.mulf %117, %118 : vector<4x256xf32>
    %120 = arith.addf %114, %119 : vector<4x256xf32>
    %121 = vector.extract_strided_slice %100 {offsets = [0, 3], sizes = [4, 1], strides = [1, 1]} : vector<4x4xf32> to vector<4x1xf32>
    %122 = vector.extract_strided_slice %1 {offsets = [3, 0], sizes = [1, 256], strides = [1, 1]} : vector<4x256xf32> to vector<1x256xf32>
    %123 = vector.broadcast %121 : vector<4x1xf32> to vector<4x256xf32>
    %124 = vector.broadcast %122 : vector<1x256xf32> to vector<4x256xf32>
    %125 = arith.mulf %123, %124 : vector<4x256xf32>
    %126 = arith.addf %120, %125 : vector<4x256xf32>
    %cst_28 = arith.constant 0.000000e+00 : f32
    %127 = vector.broadcast %cst_28 : f32 to vector<4x256xf32>
    %128 = arith.maximumf %126, %127 : vector<4x256xf32>
    %c0_29 = arith.constant 0 : index
    %c0_30 = arith.constant 0 : index
    %129 = vector.load %arg5[%c0_29, %c0_30] : memref<4x1xf32, #tpu.memory_space<vmem>>, vector<4x1xf32>
    %c0_31 = arith.constant 0 : index
    %c0_32 = arith.constant 0 : index
    %130 = vector.load %arg6[%c0_31, %c0_32] : memref<4x1xf32, #tpu.memory_space<vmem>>, vector<4x1xf32>
    %131 = vector.broadcast %130 : vector<4x1xf32> to vector<4x256xf32>
    %132 = arith.mulf %131, %70 : vector<4x256xf32>
    %133 = vector.broadcast %129 : vector<4x1xf32> to vector<4x256xf32>
    %134 = arith.addf %133, %132 : vector<4x256xf32>
    %135 = arith.maximumf %99, %128 : vector<4x256xf32>
    %136 = arith.mulf %134, %135 : vector<4x256xf32>
    %cst_33 = arith.constant 1.000000e+00 : f32
    %137 = vector.broadcast %cst_33 : f32 to vector<4x256xf32>
    %138 = arith.subf %137, %136 : vector<4x256xf32>
    %c0_34 = arith.constant 0 : index
    %c0_35 = arith.constant 0 : index
    %c0_36 = arith.constant 0 : index
    %139 = vector.load %arg8[%c0_34, %c0_35, %c0_36] : memref<1x4x256xf32, #tpu.memory_space<vmem>>, vector<1x4x256xf32>
    %140 = vector.shape_cast %139 : vector<1x4x256xf32> to vector<4x256xf32>
    %141 = vector.shape_cast %138 : vector<4x256xf32> to vector<1x4x256xf32>
    tpu.vector_store %arg8[%c0_34, %c0_35, %c0_36], %141 {strides = array<i32>} : memref<1x4x256xf32, #tpu.memory_space<vmem>>, vector<1x4x256xf32>,
    return
  }
  func.func @transform_0(%arg0: i32) -> (i32, i32) {
    %c0_i32 = arith.constant 0 : i32
    %c0_i32_0 = arith.constant 0 : i32
    %c0_i32_1 = arith.constant 0 : i32
    return %c0_i32, %c0_i32_0 : i32, i32
  }
  func.func @transform_1(%arg0: i32) -> (i32, i32) {
    %c0_i32 = arith.constant 0 : i32
    %c0_i32_0 = arith.constant 0 : i32
    %c0_i32_1 = arith.constant 0 : i32
    return %c0_i32, %c0_i32_0 : i32, i32
  }
  func.func @transform_2(%arg0: i32) -> (i32, i32) {
    %c0_i32 = arith.constant 0 : i32
    %c0_i32_0 = arith.constant 0 : i32
    %c0_i32_1 = arith.constant 0 : i32
    return %c0_i32, %c0_i32_0 : i32, i32
  }
  func.func @transform_3(%arg0: i32) -> (i32, i32) {
    %c0_i32 = arith.constant 0 : i32
    %c0_i32_0 = arith.constant 0 : i32
    %c0_i32_1 = arith.constant 0 : i32
    return %c0_i32, %c0_i32_0 : i32, i32
  }
  func.func @transform_4(%arg0: i32) -> (i32, i32) {
    %c0_i32 = arith.constant 0 : i32
    %c0_i32_0 = arith.constant 0 : i32
    %c0_i32_1 = arith.constant 0 : i32
    return %c0_i32, %c0_i32_0 : i32, i32
  }
  func.func @transform_5(%arg0: i32) -> (i32, i32) {
    %c0_i32 = arith.constant 0 : i32
    %c0_i32_0 = arith.constant 0 : i32
    %c0_i32_1 = arith.constant 0 : i32
    return %c0_i32, %c0_i32_0 : i32, i32
  }
  func.func @transform_6(%arg0: i32) -> (i32, i32, i32) {
    %c0_i32 = arith.constant 0 : i32
    %c0_i32_0 = arith.constant 0 : i32
    %c0_i32_1 = arith.constant 0 : i32
    return %arg0, %c0_i32, %c0_i32_0 : i32, i32, i32
  }
  func.func @transform_7(%arg0: i32) -> (i32, i32, i32) {
    %c0_i32 = arith.constant 0 : i32
    %c0_i32_0 = arith.constant 0 : i32
    %c0_i32_1 = arith.constant 0 : i32
    return %arg0, %c0_i32, %c0_i32_0 : i32, i32, i32
  }
}

</mosaic_0001>

<llo_original>
// kernel: pmm_forward.2
$region0: #{pmm_forward.2}
  #allocation0 [shape = 'u32[]', space=smem, size = 0x4, offset = 0x4, fixed_abs, tag = 'smem constant byte address 0x4 - core index']
  #allocation1 [shape = 'u32[144,128]{1,0:T(1,128)}', space=vmem, size = 0x12000, scoped, tag = 'internal scratch']
  %s0 = inlined_call_operand.vmem [shape: f32[2,4,256], index: 0, kind: input, shape index: {}]
  %s1 = inlined_call_operand.vmem [shape: f32[2,4,1], index: 1, kind: output, shape index: {0}]
  %s2 = inlined_call_operand.vmem [shape: f32[2,4,1], index: 2, kind: output, shape index: {1}]
  %3 = xla_tuple %s1, %s2
  %s4 = sld [smem:[#allocation0]]
  $region45: #{pmm_forward.2} parent=0
    _
  %s6 = ssub.s32 1, %s4
  %s7 = scalar_select 0, %s6, %s4
  loop: start=0, step=1, limit=4
  $region2: #{pmm_forward.2} parent=0 // loop_pre_header
    _
  $region3: #{pmm_forward.2} parent=0 // loop_header
    %s9 = sphi 0, %s13
    %p10 = scmp.ge.s32.totalorder %s9, 4
    %s19 = sphi 0, %s21
    %s22 = sphi 0, %s19
    %s23 = sphi 0, %s22
    %s39 = sphi 0, %s23
    %s45 = sphi 0, %s47
    %s48 = sphi 0, %s45
    %s49 = sphi 0, %s48
    %s65 = sphi 0, %s49
    %s71 = sphi 0, %s73
    %s74 = sphi 0, %s71
    %s75 = sphi 0, %s74
    %s91 = sphi 0, %s75
  $region4: #{pmm_forward.2} parent=0 // loop_header_branch
    %12 = sbr.rel (%p10) target = $region8
  $region5: #{pmm_forward.2} parent=0 // loop_body
    %s14 = ssub.s32 %s9, 1
    %s15 = ssub.s32 %s9, 2
    %s16 = sadd.s32 %s9, 1
    %s17 = ssub.s32 %s9, %s16
    %p18 = scmp.eq.s32.totalorder %s17, 0
    %s20 = sadd.s32 %s19, 1
    %s21 = scalar_select %p18, %s19, %s20
    %p24 = pneg %p18
    %p25 = scmp.eq.s32.totalorder %s9, 1
    %p26 = por %p24, %p25
    %p27 = scmp.ne.s32.totalorder %s19, %s22
    %p28 = scmp.eq.s32.totalorder %s9, 0
    %p29 = por %p27, %p28
    %p30 = scmp.ne.s32.totalorder %s19, %s22
    %p31 = scmp.eq.s32.totalorder %s14, 1
    %p32 = por %p30, %p31
    %p33 = scmp.ne.s32.totalorder %s22, %s23
    %p34 = scmp.eq.s32.totalorder %s14, 0
    %p35 = por %p33, %p34
    %p36 = scmp.ne.s32.totalorder %s22, %s23
    %p37 = scmp.eq.s32.totalorder %s15, 1
    %p38 = por %p36, %p37
    %p40 = scmp.ne.s32.totalorder %s23, %s39
    %p41 = scmp.eq.s32.totalorder %s15, 0
    %p42 = por %p40, %p41
    %s43 = ssub.s32 %s9, %s16
    %p44 = scmp.eq.s32.totalorder %s43, 0
    %s46 = sadd.s32 %s45, 1
    %s47 = scalar_select %p44, %s45, %s46
    %p50 = pneg %p44
    %p51 = scmp.eq.s32.totalorder %s9, 1
    %p52 = por %p50, %p51
    %p53 = scmp.ne.s32.totalorder %s45, %s48
    %p54 = scmp.eq.s32.totalorder %s9, 0
    %p55 = por %p53, %p54
    %p56 = scmp.ne.s32.totalorder %s45, %s48
    %p57 = scmp.eq.s32.totalorder %s14, 1
    %p58 = por %p56, %p57
    %p59 = scmp.ne.s32.totalorder %s48, %s49
    %p60 = scmp.eq.s32.totalorder %s14, 0
    %p61 = por %p59, %p60
    %p62 = scmp.ne.s32.totalorder %s48, %s49
    %p63 = scmp.eq.s32.totalorder %s15, 1
    %p64 = por %p62, %p63
    %p66 = scmp.ne.s32.totalorder %s49, %s65
    %p67 = scmp.eq.s32.totalorder %s15, 0
    %p68 = por %p66, %p67
    %s69 = ssub.s32 %s9, %s16
    %p70 = scmp.eq.s32.totalorder %s69, 0
    %s72 = sadd.s32 %s71, 1
    %s73 = scalar_select %p70, %s71, %s72
    %p76 = pneg %p70
    %p77 = scmp.eq.s32.totalorder %s9, 1
    %p78 = por %p76, %p77
    %p79 = scmp.ne.s32.totalorder %s71, %s74
    %p80 = scmp.eq.s32.totalorder %s9, 0
    %p81 = por %p79, %p80
    %p82 = scmp.ne.s32.totalorder %s71, %s74
    %p83 = scmp.eq.s32.totalorder %s14, 1
    %p84 = por %p82, %p83
    %p85 = scmp.ne.s32.totalorder %s74, %s75
    %p86 = scmp.eq.s32.totalorder %s14, 0
    %p87 = por %p85, %p86
    %p88 = scmp.ne.s32.totalorder %s74, %s75
    %p89 = scmp.eq.s32.totalorder %s15, 1
    %p90 = por %p88, %p89
    %p92 = scmp.ne.s32.totalorder %s75, %s91
    %p93 = scmp.eq.s32.totalorder %s15, 0
    %p94 = por %p92, %p93
    %p95 = scmp.le.s32.totalorder 1, %s9
    %p96 = scmp.lt.s32.totalorder %s9, 3
    %p97 = pnand %p95, %p96
    %p98 = pneg %p97
    // Predicated region
    $region9: #{pmm_forward.2} parent=5 // pred_check
      _
    $region10: #{pmm_forward.2} parent=5 // pred_check_branch
      %100 = sbr.rel (%p97) target = $region12
    $region11: #{pmm_forward.2} parent=5 // pred_region
      %s101 = ssub.s32 %s9, 1
    $region12: #{pmm_forward.2} parent=5 // pred_fallthru
      _
    %p102 = scmp.lt.s32.totalorder %s9, 2
    // Predicated region
    $region13: #{pmm_forward.2} parent=5 // pred_check
      %p103 = pneg %p102
    $region14: #{pmm_forward.2} parent=5 // pred_check_branch
      %105 = sbr.rel (%p103) target = $region16
    $region15: #{pmm_forward.2} parent=5 // pred_region
      // Predicated region
      $region17: #{pmm_forward.2} parent=15 // pred_check
        %p106 = pneg %p29
      $region18: #{pmm_forward.2} parent=15 // pred_check_branch
        %108 = sbr.rel (%p106) target = $region20
      $region19: #{pmm_forward.2} parent=15 // pred_region
        %p109 = scmp.lt.s32.totalorder %s9, 1
        %s110 = scalar_select %p109, %s9, 1
        %s111 = smul.addr %s110, 2
        %s112 = smul.addr %s111, 4
        %s113 = scalar_lea.vmem %s0, %s112
      $region20: #{pmm_forward.2} parent=15 // pred_fallthru
        _
    $region16: #{pmm_forward.2} parent=5 // pred_fallthru
      _
    %p114 = scmp.le.s32.totalorder 1, %s9
    %p115 = scmp.lt.s32.totalorder %s9, 3
    %p116 = pnand %p114, %p115
    %p117 = pneg %p116
    // Predicated region
    $region21: #{pmm_forward.2} parent=5 // pred_check
      _
    $region22: #{pmm_forward.2} parent=5 // pred_check_branch
      %119 = sbr.rel (%p116) target = $region24
    $region23: #{pmm_forward.2} parent=5 // pred_region
      %s120 = ssub.s32 %s9, 1
      %p121 = scmp.lt.s32.totalorder %s14, 1
      %s122 = scalar_select %p121, %s14, 1
      %s123 = smul.addr %s122, 2
      %s124 = smul.addr %s123, 4
      %s125 = scalar_lea.vmem %s0, %s124
      %p126 = pneg %p35
      %p127 = pneg %p32
      %p128 = pneg %p61
      %p129 = pneg %p58
      %p130 = scmp.lt.s32.totalorder %s14, 1
      %s131 = scalar_select %p130, %s14, 1
      %s132 = smul.addr %s131, 4
      %s133 = scalar_lea.vmem %s1, %s132
      %p134 = pneg %p87
      %p135 = pneg %p84
      %p136 = scmp.lt.s32.totalorder %s14, 1
      %s137 = scalar_select %p136, %s14, 1
      %s138 = smul.addr %s137, 4
      %s139 = scalar_lea.vmem %s2, %s138
      %p140 = scmp.lt.s32.totalorder %s14, 1
      %s141 = scalar_select %p140, %s14, 1
      %s142 = smul.addr %s141, 2
      %s143 = smul.addr %s142, 4
      %s144 = scalar_lea.vmem %s0, %s143
      %p145 = scmp.lt.s32.totalorder %s14, 1
      %s146 = scalar_select %p145, %s14, 1
      %s147 = smul.addr %s146, 4
      %s148 = scalar_lea.vmem %s1, %s147
      %p149 = scmp.lt.s32.totalorder %s14, 1
      %s150 = scalar_select %p149, %s14, 1
      %s151 = smul.addr %s150, 4
      %s152 = scalar_lea.vmem %s2, %s151
      %v153 = vld [vmem:[%s144] sm:$0xff]
      %v154 = vlaneseq
      %v155 = vand.u32 %v154, 127
      %v156 = vadd.s32 %v155, 128
      %vm157 = vcmp.lt.s32.totalorder %v155, 0
      %v158 = vsub.s32 0, %v155
      %v159 = vsel %vm157, %v158, %v155
      %v160 = vshrl.u32 %v159, 4
      %v161 = vand.u32 %v159, 15
      %v162 = vsub.s32 0, %v161
      %v163 = vsel %vm157, %v162, %v161
      %vm164 = vcmp.lt.s32.totalorder %v156, 0
      %v165 = vsub.s32 0, %v156
      %v166 = vsel %vm164, %v165, %v156
      %v167 = vshrl.u32 %v166, 4
      %v168 = vand.u32 %v166, 15
      %v169 = vsub.s32 0, %v168
      %v170 = vsel %vm164, %v169, %v168
      %vm171 = vcmp.ne.s32.totalorder %v163, 0
      %vm172 = vcmp.ne.s32.totalorder %v170, 0
      %vm173 = vcmp.lt.s32.totalorder %v163, 0
      %vm174 = vcmp.lt.s32.totalorder %v170, 0
      %vm175 = vmand %vm173, %vm171
      %vm176 = vmand %vm174, %vm172
      %v177 = vadd.s32 %v163, 16
      %v178 = vadd.s32 %v170, 16
      %v179 = vsel %vm175, %v177, %v163
      %v180 = vsel %vm176, %v178, %v170
      %vm181 = vcmp.ne.s32.totalorder %v179, 0
      %vm182 = vcmp.ne.s32.totalorder %v180, 0
      %vm183 = vcmp.ne.s32.totalorder %v179, 15
      %vm184 = vcmp.ne.s32.totalorder %v180, 15
      %vm185 = vcmp.ge.s32.totalorder %v155, 16
      %vm186 = vcmp.ge.s32.totalorder %v156, 16
      %vm187 = vcmp.lt.s32.totalorder %v155, 240
      %vm188 = vcmp.lt.s32.totalorder %v156, 240
      %v190 = vcombine.high %v153, %v153
      %192 = vrot.lane.b32.xlu0 %v153, 1
      %v193 = vpop.permute.xlu0 %192
      %194 = vrot.lane.b32.xlu0 %v190, 1
      %v195 = vpop.permute.xlu0 %194
      %vm196 = vcmp.lt.s32.totalorder %v155, 1
      %v197 = vsel %vm196, %v193, %v195
      %v198 = vsel %vm196, %v195, %v193
      %v199 = vsel %vm181, 1, 0
      %v200 = vsel %vm182, 1, 0
      %vm201 = vcmp.eq.s32.totalorder %v199, 1
      %vm202 = vcmp.eq.s32.totalorder %v200, 1
      %v203 = vsel %vm201, %v198, 0.0
      %v204 = vsel %vm202, %v197, 0.0
      %205 = vrot.lane.b32.xlu0 %v153, 127
      %v206 = vpop.permute.xlu0 %205
      %207 = vrot.lane.b32.xlu0 %v190, 127
      %v208 = vpop.permute.xlu0 %207
      %vm209 = vcmp.lt.s32.totalorder %v155, 127
      %v210 = vsel %vm209, %v206, %v208
      %v211 = vsel %vm209, %v208, %v206
      %v212 = vsel %vm183, 1, 0
      %v213 = vsel %vm184, 1, 0
      %vm214 = vcmp.eq.s32.totalorder %v212, 1
      %vm215 = vcmp.eq.s32.totalorder %v213, 1
      %v216 = vsel %vm214, %v210, 0.0
      %v217 = vsel %vm215, %v211, 0.0
      %v218 = vsub.f32 %v216, %v203
      %v219 = vsub.f32 %v217, %v204
      %v220 = vmul.f32 %v153, 2.0
      %v222 = vcombine.high %v220, %v220
      %v224 = vadd.f32 %v203, %v220
      %v225 = vadd.f32 %v204, %v222
      %v226 = vadd.f32 %v224, %v216
      %v227 = vadd.f32 %v225, %v217
      %228 = vrot.lane.b32.xlu0 %v218, 16
      %v229 = vpop.permute.xlu0 %228
      %230 = vrot.lane.b32.xlu0 %v219, 16
      %v231 = vpop.permute.xlu0 %230
      %vm232 = vcmp.lt.s32.totalorder %v155, 16
      %v233 = vsel %vm232, %v229, %v231
      %v234 = vsel %vm232, %v231, %v229
      %v235 = vsel %vm185, 1, 0
      %v236 = vsel %vm186, 1, 0
      %vm237 = vcmp.eq.s32.totalorder %v235, 1
      %vm238 = vcmp.eq.s32.totalorder %v236, 1
      %v239 = vsel %vm237, %v234, 0.0
      %v240 = vsel %vm238, %v233, 0.0
      %241 = vrot.lane.b32.xlu0 %v218, 112
      %v242 = vpop.permute.xlu0 %241
      %243 = vrot.lane.b32.xlu0 %v219, 112
      %v244 = vpop.permute.xlu0 %243
      %vm245 = vcmp.lt.s32.totalorder %v155, 112
      %v246 = vsel %vm245, %v242, %v244
      %v247 = vsel %vm245, %v244, %v242
      %v248 = vsel %vm187, 1, 0
      %v249 = vsel %vm188, 1, 0
      %vm250 = vcmp.eq.s32.totalorder %v248, 1
      %vm251 = vcmp.eq.s32.totalorder %v249, 1
      %v252 = vsel %vm250, %v246, 0.0
      %v253 = vsel %vm251, %v247, 0.0
      %254 = vrot.lane.b32.xlu0 %v226, 16
      %v255 = vpop.permute.xlu0 %254
      %256 = vrot.lane.b32.xlu0 %v227, 16
      %v257 = vpop.permute.xlu0 %256
      %v258 = vsel %vm232, %v255, %v257
      %v259 = vsel %vm232, %v257, %v255
      %v260 = vsel %vm237, %v259, 0.0
      %v261 = vsel %vm238, %v258, 0.0
      %262 = vrot.lane.b32.xlu0 %v226, 112
      %v263 = vpop.permute.xlu0 %262
      %264 = vrot.lane.b32.xlu0 %v227, 112
      %v265 = vpop.permute.xlu0 %264
      %v266 = vsel %vm245, %v263, %v265
      %v267 = vsel %vm245, %v265, %v263
      %v268 = vsel %vm250, %v266, 0.0
      %v269 = vsel %vm251, %v267, 0.0
      %v270 = vmul.f32 %v218, 2.0
      %v271 = vmul.f32 %v219, 2.0
      %v272 = vadd.f32 %v239, %v270
      %v273 = vadd.f32 %v240, %v271
      %v274 = vadd.f32 %v272, %v252
      %v275 = vadd.f32 %v273, %v253
      %v276 = vsub.f32 %v268, %v260
      %v277 = vsub.f32 %v269, %v261
      %v278 = vmul.f32 %v274, %v274
      %v279 = vmul.f32 %v275, %v275
      %v280 = vmul.f32 %v276, %v276
      %v281 = vmul.f32 %v277, %v277
      %v282 = vadd.f32 %v278, %v280
      %v283 = vadd.f32 %v279, %v281
      %v284 = vrsqrt.pop %v282
      %v285 = vmul.f32 %v282, %v284
      %vm286 = vcmp.eq.f32.partialorder %v282, inf
      %v287 = vsel %vm286, %v282, %v285
      %vm288 = vcmp.eq.f32.partialorder %v282, 0.0
      %v289 = vand.u32 %v282, 2147483648
      %v290 = vsel %vm288, %v289, %v287
      %v291 = vrsqrt.pop %v283
      %v292 = vmul.f32 %v283, %v291
      %vm293 = vcmp.eq.f32.partialorder %v283, inf
      %v294 = vsel %vm293, %v283, %v292
      %vm295 = vcmp.eq.f32.partialorder %v283, 0.0
      %v296 = vand.u32 %v283, 2147483648
      %v297 = vsel %vm295, %v296, %v294
      %vm298 = vcmask 1043456
      %v299 = vsel %vm298, %v290, 0.0
      %v300 = vsel %vm298, %v297, 0.0
      %v301 = vadd.f32 %v299, %v300
      %302 = vadd.xlane.f32.xlu0 %v301
      %v303 = vpop.xlane.xlu0 %302
      %vm304 = vcmask 3072
      %305 = vst.msk [vmem:[%s148] sm:$0xf] %vm304, %v303
      %v306 = vmul.f32 %v290, %v290
      %v307 = vmul.f32 %v297, %v297
      %v308 = vsel %vm298, %v306, 0.0
      %v309 = vsel %vm298, %v307, 0.0
      %v310 = vadd.f32 %v308, %v309
      %311 = vadd.xlane.f32.xlu0 %v310
      %v312 = vpop.xlane.xlu0 %311
      %313 = vst.msk [vmem:[%s152] sm:$0xf] %vm304, %v312
      %p314 = scmp.lt.s32.totalorder %s14, 1
      %s315 = scalar_select %p314, %s14, 1
      %s316 = smul.addr %s315, 4
      %s317 = scalar_lea.vmem %s1, %s316
      %p318 = scmp.lt.s32.totalorder %s14, 1
      %s319 = scalar_select %p318, %s14, 1
      %s320 = smul.addr %s319, 4
      %s321 = scalar_lea.vmem %s2, %s320
      // Predicated region
      $region25: #{pmm_forward.2} parent=23 // pred_check
        %p322 = pneg %p58
      $region26: #{pmm_forward.2} parent=23 // pred_check_branch
        %324 = sbr.rel (%p322) target = $region28
      $region27: #{pmm_forward.2} parent=23 // pred_region
        _
      $region28: #{pmm_forward.2} parent=23 // pred_fallthru
        _
      // Predicated region
      $region29: #{pmm_forward.2} parent=23 // pred_check
        %p325 = pneg %p84
      $region30: #{pmm_forward.2} parent=23 // pred_check_branch
        %327 = sbr.rel (%p325) target = $region32
      $region31: #{pmm_forward.2} parent=23 // pred_region
        _
      $region32: #{pmm_forward.2} parent=23 // pred_fallthru
        _
    $region24: #{pmm_forward.2} parent=5 // pred_fallthru
      _
    %p328 = scmp.le.s32.totalorder 2, %s9
    // Predicated region
    $region33: #{pmm_forward.2} parent=5 // pred_check
      %p329 = pneg %p328
    $region34: #{pmm_forward.2} parent=5 // pred_check_branch
      %331 = sbr.rel (%p329) target = $region36
    $region35: #{pmm_forward.2} parent=5 // pred_region
      %s332 = ssub.s32 %s9, 2
      // Predicated region
      $region37: #{pmm_forward.2} parent=35 // pred_check
        %p333 = pneg %p64
      $region38: #{pmm_forward.2} parent=35 // pred_check_branch
        %335 = sbr.rel (%p333) target = $region40
      $region39: #{pmm_forward.2} parent=35 // pred_region
        %p336 = scmp.lt.s32.totalorder %s15, 1
        %s337 = scalar_select %p336, %s15, 1
        %s338 = smul.addr %s337, 4
        %s339 = scalar_lea.vmem %s1, %s338
      $region40: #{pmm_forward.2} parent=35 // pred_fallthru
        _
      // Predicated region
      $region41: #{pmm_forward.2} parent=35 // pred_check
        %p340 = pneg %p90
      $region42: #{pmm_forward.2} parent=35 // pred_check_branch
        %342 = sbr.rel (%p340) target = $region44
      $region43: #{pmm_forward.2} parent=35 // pred_region
        %p343 = scmp.lt.s32.totalorder %s15, 1
        %s344 = scalar_select %p343, %s15, 1
        %s345 = smul.addr %s344, 4
        %s346 = scalar_lea.vmem %s2, %s345
      $region44: #{pmm_forward.2} parent=35 // pred_fallthru
        _
    $region36: #{pmm_forward.2} parent=5 // pred_fallthru
      _
  $region6: #{pmm_forward.2} parent=0 // loop_footer
    %s13 = sadd.s32 1, %s9
  $region7: #{pmm_forward.2} parent=0 // loop_footer_branch
    %8 = sbr.rel target = $region3
  $region8: #{pmm_forward.2} parent=0 // loop_exit
    _

// kernel: pmm_forward.3
$region0: #{pmm_forward.3}
  #allocation0 [shape = 'u32[]', space=smem, size = 0x4, offset = 0x4, fixed_abs, tag = 'smem constant byte address 0x4 - core index']
  #allocation1 [shape = 'u32[144,128]{1,0:T(1,128)}', space=vmem, size = 0x12000, scoped, tag = 'internal scratch']
  %s0 = inlined_call_operand.vmem [shape: f32[4,4], index: 0, kind: input, shape index: {}]
  %s1 = inlined_call_operand.vmem [shape: f32[4,4], index: 1, kind: input, shape index: {}]
  %s2 = inlined_call_operand.vmem [shape: f32[4,1], index: 2, kind: input, shape index: {}]
  %s3 = inlined_call_operand.vmem [shape: f32[4,1], index: 3, kind: input, shape index: {}]
  %s4 = inlined_call_operand.vmem [shape: f32[4,1], index: 4, kind: input, shape index: {}]
  %s5 = inlined_call_operand.vmem [shape: f32[4,1], index: 5, kind: input, shape index: {}]
  %s6 = inlined_call_operand.vmem [shape: f32[2,4,256], index: 6, kind: input, shape index: {}]
  %s7 = inlined_call_operand.vmem [shape: f32[2,4,256], index: 7, kind: output, shape index: {}]
  %s8 = sld [smem:[#allocation0]]
  $region61: #{pmm_forward.3} parent=0
    _
  %s10 = ssub.s32 1, %s8
  %s11 = scalar_select 0, %s10, %s8
  loop: start=0, step=1, limit=4
  $region2: #{pmm_forward.3} parent=0 // loop_pre_header
    _
  $region3: #{pmm_forward.3} parent=0 // loop_header
    %s13 = sphi 0, %s17
    %p14 = scmp.ge.s32.totalorder %s13, 4
    %s21 = sphi 0, %s21
    %s23 = sphi 0, %s21
    %s24 = sphi 0, %s23
    %s38 = sphi 0, %s24
    %s42 = sphi 0, %s42
    %s44 = sphi 0, %s42
    %s45 = sphi 0, %s44
    %s59 = sphi 0, %s45
    %s63 = sphi 0, %s63
    %s65 = sphi 0, %s63
    %s66 = sphi 0, %s65
    %s80 = sphi 0, %s66
    %s84 = sphi 0, %s84
    %s86 = sphi 0, %s84
    %s87 = sphi 0, %s86
    %s101 = sphi 0, %s87
    %s105 = sphi 0, %s105
    %s107 = sphi 0, %s105
    %s108 = sphi 0, %s107
    %s122 = sphi 0, %s108
    %s126 = sphi 0, %s126
    %s128 = sphi 0, %s126
    %s129 = sphi 0, %s128
    %s143 = sphi 0, %s129
    %s149 = sphi 0, %s151
    %s152 = sphi 0, %s149
    %s153 = sphi 0, %s152
    %s169 = sphi 0, %s153
    %s175 = sphi 0, %s177
    %s178 = sphi 0, %s175
    %s179 = sphi 0, %s178
    %s195 = sphi 0, %s179
  $region4: #{pmm_forward.3} parent=0 // loop_header_branch
    %16 = sbr.rel (%p14) target = $region8
  $region5: #{pmm_forward.3} parent=0 // loop_body
    %s18 = ssub.s32 %s13, 1
    %s19 = ssub.s32 %s13, 2
    %s20 = sadd.s32 %s13, 1
    %s22 = sadd.s32 %s21, 1
    %p25 = scmp.eq.s32.totalorder %s13, 1
    %p26 = scmp.ne.s32.totalorder %s21, %s23
    %p27 = scmp.eq.s32.totalorder %s13, 0
    %p28 = por %p26, %p27
    %p29 = scmp.ne.s32.totalorder %s21, %s23
    %p30 = scmp.eq.s32.totalorder %s18, 1
    %p31 = por %p29, %p30
    %p32 = scmp.ne.s32.totalorder %s23, %s24
    %p33 = scmp.eq.s32.totalorder %s18, 0
    %p34 = por %p32, %p33
    %p35 = scmp.ne.s32.totalorder %s23, %s24
    %p36 = scmp.eq.s32.totalorder %s19, 1
    %p37 = por %p35, %p36
    %p39 = scmp.ne.s32.totalorder %s24, %s38
    %p40 = scmp.eq.s32.totalorder %s19, 0
    %p41 = por %p39, %p40
    %s43 = sadd.s32 %s42, 1
    %p46 = scmp.eq.s32.totalorder %s13, 1
    %p47 = scmp.ne.s32.totalorder %s42, %s44
    %p48 = scmp.eq.s32.totalorder %s13, 0
    %p49 = por %p47, %p48
    %p50 = scmp.ne.s32.totalorder %s42, %s44
    %p51 = scmp.eq.s32.totalorder %s18, 1
    %p52 = por %p50, %p51
    %p53 = scmp.ne.s32.totalorder %s44, %s45
    %p54 = scmp.eq.s32.totalorder %s18, 0
    %p55 = por %p53, %p54
    %p56 = scmp.ne.s32.totalorder %s44, %s45
    %p57 = scmp.eq.s32.totalorder %s19, 1
    %p58 = por %p56, %p57
    %p60 = scmp.ne.s32.totalorder %s45, %s59
    %p61 = scmp.eq.s32.totalorder %s19, 0
    %p62 = por %p60, %p61
    %s64 = sadd.s32 %s63, 1
    %p67 = scmp.eq.s32.totalorder %s13, 1
    %p68 = scmp.ne.s32.totalorder %s63, %s65
    %p69 = scmp.eq.s32.totalorder %s13, 0
    %p70 = por %p68, %p69
    %p71 = scmp.ne.s32.totalorder %s63, %s65
    %p72 = scmp.eq.s32.totalorder %s18, 1
    %p73 = por %p71, %p72
    %p74 = scmp.ne.s32.totalorder %s65, %s66
    %p75 = scmp.eq.s32.totalorder %s18, 0
    %p76 = por %p74, %p75
    %p77 = scmp.ne.s32.totalorder %s65, %s66
    %p78 = scmp.eq.s32.totalorder %s19, 1
    %p79 = por %p77, %p78
    %p81 = scmp.ne.s32.totalorder %s66, %s80
    %p82 = scmp.eq.s32.totalorder %s19, 0
    %p83 = por %p81, %p82
    %s85 = sadd.s32 %s84, 1
    %p88 = scmp.eq.s32.totalorder %s13, 1
    %p89 = scmp.ne.s32.totalorder %s84, %s86
    %p90 = scmp.eq.s32.totalorder %s13, 0
    %p91 = por %p89, %p90
    %p92 = scmp.ne.s32.totalorder %s84, %s86
    %p93 = scmp.eq.s32.totalorder %s18, 1
    %p94 = por %p92, %p93
    %p95 = scmp.ne.s32.totalorder %s86, %s87
    %p96 = scmp.eq.s32.totalorder %s18, 0
    %p97 = por %p95, %p96
    %p98 = scmp.ne.s32.totalorder %s86, %s87
    %p99 = scmp.eq.s32.totalorder %s19, 1
    %p100 = por %p98, %p99
    %p102 = scmp.ne.s32.totalorder %s87, %s101
    %p103 = scmp.eq.s32.totalorder %s19, 0
    %p104 = por %p102, %p103
    %s106 = sadd.s32 %s105, 1
    %p109 = scmp.eq.s32.totalorder %s13, 1
    %p110 = scmp.ne.s32.totalorder %s105, %s107
    %p111 = scmp.eq.s32.totalorder %s13, 0
    %p112 = por %p110, %p111
    %p113 = scmp.ne.s32.totalorder %s105, %s107
    %p114 = scmp.eq.s32.totalorder %s18, 1
    %p115 = por %p113, %p114
    %p116 = scmp.ne.s32.totalorder %s107, %s108
    %p117 = scmp.eq.s32.totalorder %s18, 0
    %p118 = por %p116, %p117
    %p119 = scmp.ne.s32.totalorder %s107, %s108
    %p120 = scmp.eq.s32.totalorder %s19, 1
    %p121 = por %p119, %p120
    %p123 = scmp.ne.s32.totalorder %s108, %s122
    %p124 = scmp.eq.s32.totalorder %s19, 0
    %p125 = por %p123, %p124
    %s127 = sadd.s32 %s126, 1
    %p130 = scmp.eq.s32.totalorder %s13, 1
    %p131 = scmp.ne.s32.totalorder %s126, %s128
    %p132 = scmp.eq.s32.totalorder %s13, 0
    %p133 = por %p131, %p132
    %p134 = scmp.ne.s32.totalorder %s126, %s128
    %p135 = scmp.eq.s32.totalorder %s18, 1
    %p136 = por %p134, %p135
    %p137 = scmp.ne.s32.totalorder %s128, %s129
    %p138 = scmp.eq.s32.totalorder %s18, 0
    %p139 = por %p137, %p138
    %p140 = scmp.ne.s32.totalorder %s128, %s129
    %p141 = scmp.eq.s32.totalorder %s19, 1
    %p142 = por %p140, %p141
    %p144 = scmp.ne.s32.totalorder %s129, %s143
    %p145 = scmp.eq.s32.totalorder %s19, 0
    %p146 = por %p144, %p145
    %s147 = ssub.s32 %s13, %s20
    %p148 = scmp.eq.s32.totalorder %s147, 0
    %s150 = sadd.s32 %s149, 1
    %s151 = scalar_select %p148, %s149, %s150
    %p154 = pneg %p148
    %p155 = scmp.eq.s32.totalorder %s13, 1
    %p156 = por %p154, %p155
    %p157 = scmp.ne.s32.totalorder %s149, %s152
    %p158 = scmp.eq.s32.totalorder %s13, 0
    %p159 = por %p157, %p158
    %p160 = scmp.ne.s32.totalorder %s149, %s152
    %p161 = scmp.eq.s32.totalorder %s18, 1
    %p162 = por %p160, %p161
    %p163 = scmp.ne.s32.totalorder %s152, %s153
    %p164 = scmp.eq.s32.totalorder %s18, 0
    %p165 = por %p163, %p164
    %p166 = scmp.ne.s32.totalorder %s152, %s153
    %p167 = scmp.eq.s32.totalorder %s19, 1
    %p168 = por %p166, %p167
    %p170 = scmp.ne.s32.totalorder %s153, %s169
    %p171 = scmp.eq.s32.totalorder %s19, 0
    %p172 = por %p170, %p171
    %s173 = ssub.s32 %s13, %s20
    %p174 = scmp.eq.s32.totalorder %s173, 0
    %s176 = sadd.s32 %s175, 1
    %s177 = scalar_select %p174, %s175, %s176
    %p180 = pneg %p174
    %p181 = scmp.eq.s32.totalorder %s13, 1
    %p182 = por %p180, %p181
    %p183 = scmp.ne.s32.totalorder %s175, %s178
    %p184 = scmp.eq.s32.totalorder %s13, 0
    %p185 = por %p183, %p184
    %p186 = scmp.ne.s32.totalorder %s175, %s178
    %p187 = scmp.eq.s32.totalorder %s18, 1
    %p188 = por %p186, %p187
    %p189 = scmp.ne.s32.totalorder %s178, %s179
    %p190 = scmp.eq.s32.totalorder %s18, 0
    %p191 = por %p189, %p190
    %p192 = scmp.ne.s32.totalorder %s178, %s179
    %p193 = scmp.eq.s32.totalorder %s19, 1
    %p194 = por %p192, %p193
    %p196 = scmp.ne.s32.totalorder %s179, %s195
    %p197 = scmp.eq.s32.totalorder %s19, 0
    %p198 = por %p196, %p197
    %p199 = scmp.le.s32.totalorder 1, %s13
    %p200 = scmp.lt.s32.totalorder %s13, 3
    %p201 = pnand %p199, %p200
    %p202 = pneg %p201
    // Predicated region
    $region9: #{pmm_forward.3} parent=5 // pred_check
      _
    $region10: #{pmm_forward.3} parent=5 // pred_check_branch
      %204 = sbr.rel (%p201) target = $region12
    $region11: #{pmm_forward.3} parent=5 // pred_region
      %s205 = ssub.s32 %s13, 1
      // Predicated region
      $region13: #{pmm_forward.3} parent=11 // pred_check
        %p206 = pneg %p34
      $region14: #{pmm_forward.3} parent=11 // pred_check_branch
        %208 = sbr.rel (%p206) target = $region16
      $region15: #{pmm_forward.3} parent=11 // pred_region
        _
      $region16: #{pmm_forward.3} parent=11 // pred_fallthru
        _
      // Predicated region
      $region17: #{pmm_forward.3} parent=11 // pred_check
        %p209 = pneg %p55
      $region18: #{pmm_forward.3} parent=11 // pred_check_branch
        %211 = sbr.rel (%p209) target = $region20
      $region19: #{pmm_forward.3} parent=11 // pred_region
        _
      $region20: #{pmm_forward.3} parent=11 // pred_fallthru
        _
      // Predicated region
      $region21: #{pmm_forward.3} parent=11 // pred_check
        %p212 = pneg %p76
      $region22: #{pmm_forward.3} parent=11 // pred_check_branch
        %214 = sbr.rel (%p212) target = $region24
      $region23: #{pmm_forward.3} parent=11 // pred_region
        _
      $region24: #{pmm_forward.3} parent=11 // pred_fallthru
        _
      // Predicated region
      $region25: #{pmm_forward.3} parent=11 // pred_check
        %p215 = pneg %p97
      $region26: #{pmm_forward.3} parent=11 // pred_check_branch
        %217 = sbr.rel (%p215) target = $region28
      $region27: #{pmm_forward.3} parent=11 // pred_region
        _
      $region28: #{pmm_forward.3} parent=11 // pred_fallthru
        _
      // Predicated region
      $region29: #{pmm_forward.3} parent=11 // pred_check
        %p218 = pneg %p118
      $region30: #{pmm_forward.3} parent=11 // pred_check_branch
        %220 = sbr.rel (%p218) target = $region32
      $region31: #{pmm_forward.3} parent=11 // pred_region
        _
      $region32: #{pmm_forward.3} parent=11 // pred_fallthru
        _
      // Predicated region
      $region33: #{pmm_forward.3} parent=11 // pred_check
        %p221 = pneg %p139
      $region34: #{pmm_forward.3} parent=11 // pred_check_branch
        %223 = sbr.rel (%p221) target = $region36
      $region35: #{pmm_forward.3} parent=11 // pred_region
        _
      $region36: #{pmm_forward.3} parent=11 // pred_fallthru
        _
    $region12: #{pmm_forward.3} parent=5 // pred_fallthru
      _
    %p224 = scmp.lt.s32.totalorder %s13, 2
    // Predicated region
    $region37: #{pmm_forward.3} parent=5 // pred_check
      %p225 = pneg %p224
    $region38: #{pmm_forward.3} parent=5 // pred_check_branch
      %227 = sbr.rel (%p225) target = $region40
    $region39: #{pmm_forward.3} parent=5 // pred_region
      // Predicated region
      $region41: #{pmm_forward.3} parent=39 // pred_check
        %p228 = pneg %p159
      $region42: #{pmm_forward.3} parent=39 // pred_check_branch
        %230 = sbr.rel (%p228) target = $region44
      $region43: #{pmm_forward.3} parent=39 // pred_region
        %p231 = scmp.lt.s32.totalorder %s13, 1
        %s232 = scalar_select %p231, %s13, 1
        %s233 = smul.addr %s232, 2
        %s234 = smul.addr %s233, 4
        %s235 = scalar_lea.vmem %s6, %s234
      $region44: #{pmm_forward.3} parent=39 // pred_fallthru
        _
    $region40: #{pmm_forward.3} parent=5 // pred_fallthru
      _
    %p236 = scmp.le.s32.totalorder 1, %s13
    %p237 = scmp.lt.s32.totalorder %s13, 3
    %p238 = pnand %p236, %p237
    %p239 = pneg %p238
    // Predicated region
    $region45: #{pmm_forward.3} parent=5 // pred_check
      _
    $region46: #{pmm_forward.3} parent=5 // pred_check_branch
      %241 = sbr.rel (%p238) target = $region48
    $region47: #{pmm_forward.3} parent=5 // pred_region
      %s242 = ssub.s32 %s13, 1
      %p243 = pneg %p34
      %p244 = pneg %p31
      %p245 = pneg %p55
      %p246 = pneg %p52
      %p247 = pneg %p76
      %p248 = pneg %p73
      %p249 = pneg %p97
      %p250 = pneg %p94
      %p251 = pneg %p118
      %p252 = pneg %p115
      %p253 = pneg %p139
      %p254 = pneg %p136
      %p255 = scmp.lt.s32.totalorder %s18, 1
      %s256 = scalar_select %p255, %s18, 1
      %s257 = smul.addr %s256, 2
      %s258 = smul.addr %s257, 4
      %s259 = scalar_lea.vmem %s6, %s258
      %p260 = pneg %p165
      %p261 = pneg %p162
      %p262 = pneg %p191
      %p263 = pneg %p188
      %p264 = scmp.lt.s32.totalorder %s18, 1
      %s265 = scalar_select %p264, %s18, 1
      %s266 = smul.addr %s265, 2
      %s267 = smul.addr %s266, 4
      %s268 = scalar_lea.vmem %s7, %s267
      %p269 = scmp.lt.s32.totalorder %s18, 1
      %s270 = scalar_select %p269, %s18, 1
      %s271 = smul.addr %s270, 2
      %s272 = smul.addr %s271, 4
      %s273 = scalar_lea.vmem %s6, %s272
      %p274 = scmp.lt.s32.totalorder %s18, 1
      %s275 = scalar_select %p274, %s18, 1
      %s276 = smul.addr %s275, 2
      %s277 = smul.addr %s276, 4
      %s278 = scalar_lea.vmem %s7, %s277
      %v279 = vld [vmem:[%s273] sm:$0xff]
      %v280 = vlaneseq
      %v281 = vand.u32 %v280, 127
      %v282 = vadd.s32 %v281, 128
      %vm283 = vcmp.lt.s32.totalorder %v281, 0
      %v284 = vsub.s32 0, %v281
      %v285 = vsel %vm283, %v284, %v281
      %v286 = vshrl.u32 %v285, 4
      %v287 = vand.u32 %v285, 15
      %v288 = vsub.s32 0, %v287
      %v289 = vsel %vm283, %v288, %v287
      %vm290 = vcmp.lt.s32.totalorder %v282, 0
      %v291 = vsub.s32 0, %v282
      %v292 = vsel %vm290, %v291, %v282
      %v293 = vshrl.u32 %v292, 4
      %v294 = vand.u32 %v292, 15
      %v295 = vsub.s32 0, %v294
      %v296 = vsel %vm290, %v295, %v294
      %vm297 = vcmp.ne.s32.totalorder %v289, 0
      %vm298 = vcmp.ne.s32.totalorder %v296, 0
      %vm299 = vcmp.lt.s32.totalorder %v289, 0
      %vm300 = vcmp.lt.s32.totalorder %v296, 0
      %vm301 = vmand %vm299, %vm297
      %vm302 = vmand %vm300, %vm298
      %v303 = vadd.s32 %v289, 16
      %v304 = vadd.s32 %v296, 16
      %v305 = vsel %vm301, %v303, %v289
      %v306 = vsel %vm302, %v304, %v296
      %vm307 = vcmp.ne.s32.totalorder %v305, 0
      %vm308 = vcmp.ne.s32.totalorder %v306, 0
      %vm309 = vcmp.ne.s32.totalorder %v305, 15
      %vm310 = vcmp.ne.s32.totalorder %v306, 15
      %vm311 = vcmp.ge.s32.totalorder %v281, 16
      %vm312 = vcmp.ge.s32.totalorder %v282, 16
      %vm313 = vcmp.lt.s32.totalorder %v281, 240
      %vm314 = vcmp.lt.s32.totalorder %v282, 240
      %v316 = vcombine.high %v279, %v279
      %318 = vrot.lane.b32.xlu0 %v279, 1
      %v319 = vpop.permute.xlu0 %318
      %320 = vrot.lane.b32.xlu0 %v316, 1
      %v321 = vpop.permute.xlu0 %320
      %vm322 = vcmp.lt.s32.totalorder %v281, 1
      %v323 = vsel %vm322, %v319, %v321
      %v324 = vsel %vm322, %v321, %v319
      %v325 = vsel %vm307, 1, 0
      %v326 = vsel %vm308, 1, 0
      %vm327 = vcmp.eq.s32.totalorder %v325, 1
      %vm328 = vcmp.eq.s32.totalorder %v326, 1
      %v329 = vsel %vm327, %v324, 0.0
      %v330 = vsel %vm328, %v323, 0.0
      %331 = vrot.lane.b32.xlu0 %v279, 127
      %v332 = vpop.permute.xlu0 %331
      %333 = vrot.lane.b32.xlu0 %v316, 127
      %v334 = vpop.permute.xlu0 %333
      %vm335 = vcmp.lt.s32.totalorder %v281, 127
      %v336 = vsel %vm335, %v332, %v334
      %v337 = vsel %vm335, %v334, %v332
      %v338 = vsel %vm309, 1, 0
      %v339 = vsel %vm310, 1, 0
      %vm340 = vcmp.eq.s32.totalorder %v338, 1
      %vm341 = vcmp.eq.s32.totalorder %v339, 1
      %v342 = vsel %vm340, %v336, 0.0
      %v343 = vsel %vm341, %v337, 0.0
      %v344 = vsub.f32 %v342, %v329
      %v345 = vsub.f32 %v343, %v330
      %v346 = vmul.f32 %v279, 2.0
      %v348 = vcombine.high %v346, %v346
      %v350 = vadd.f32 %v329, %v346
      %v351 = vadd.f32 %v330, %v348
      %v352 = vadd.f32 %v350, %v342
      %v353 = vadd.f32 %v351, %v343
      %354 = vrot.lane.b32.xlu0 %v344, 16
      %v355 = vpop.permute.xlu0 %354
      %356 = vrot.lane.b32.xlu0 %v345, 16
      %v357 = vpop.permute.xlu0 %356
      %vm358 = vcmp.lt.s32.totalorder %v281, 16
      %v359 = vsel %vm358, %v355, %v357
      %v360 = vsel %vm358, %v357, %v355
      %v361 = vsel %vm311, 1, 0
      %v362 = vsel %vm312, 1, 0
      %vm363 = vcmp.eq.s32.totalorder %v361, 1
      %vm364 = vcmp.eq.s32.totalorder %v362, 1
      %v365 = vsel %vm363, %v360, 0.0
      %v366 = vsel %vm364, %v359, 0.0
      %367 = vrot.lane.b32.xlu0 %v344, 112
      %v368 = vpop.permute.xlu0 %367
      %369 = vrot.lane.b32.xlu0 %v345, 112
      %v370 = vpop.permute.xlu0 %369
      %vm371 = vcmp.lt.s32.totalorder %v281, 112
      %v372 = vsel %vm371, %v368, %v370
      %v373 = vsel %vm371, %v370, %v368
      %v374 = vsel %vm313, 1, 0
      %v375 = vsel %vm314, 1, 0
      %vm376 = vcmp.eq.s32.totalorder %v374, 1
      %vm377 = vcmp.eq.s32.totalorder %v375, 1
      %v378 = vsel %vm376, %v372, 0.0
      %v379 = vsel %vm377, %v373, 0.0
      %380 = vrot.lane.b32.xlu0 %v352, 16
      %v381 = vpop.permute.xlu0 %380
      %382 = vrot.lane.b32.xlu0 %v353, 16
      %v383 = vpop.permute.xlu0 %382
      %v384 = vsel %vm358, %v381, %v383
      %v385 = vsel %vm358, %v383, %v381
      %v386 = vsel %vm363, %v385, 0.0
      %v387 = vsel %vm364, %v384, 0.0
      %388 = vrot.lane.b32.xlu0 %v352, 112
      %v389 = vpop.permute.xlu0 %388
      %390 = vrot.lane.b32.xlu0 %v353, 112
      %v391 = vpop.permute.xlu0 %390
      %v392 = vsel %vm371, %v389, %v391
      %v393 = vsel %vm371, %v391, %v389
      %v394 = vsel %vm376, %v392, 0.0
      %v395 = vsel %vm377, %v393, 0.0
      %v396 = vmul.f32 %v344, 2.0
      %v397 = vmul.f32 %v345, 2.0
      %v398 = vadd.f32 %v365, %v396
      %v399 = vadd.f32 %v366, %v397
      %v400 = vadd.f32 %v398, %v378
      %v401 = vadd.f32 %v399, %v379
      %v402 = vsub.f32 %v394, %v386
      %v403 = vsub.f32 %v395, %v387
      %v404 = vmul.f32 %v400, %v400
      %v405 = vmul.f32 %v401, %v401
      %v406 = vmul.f32 %v402, %v402
      %v407 = vmul.f32 %v403, %v403
      %v408 = vadd.f32 %v404, %v406
      %v409 = vadd.f32 %v405, %v407
      %v410 = vrsqrt.pop %v408
      %v411 = vmul.f32 %v408, %v410
      %vm412 = vcmp.eq.f32.partialorder %v408, inf
      %v413 = vsel %vm412, %v408, %v411
      %vm414 = vcmp.eq.f32.partialorder %v408, 0.0
      %v415 = vand.u32 %v408, 2147483648
      %v416 = vsel %vm414, %v415, %v413
      %v417 = vrsqrt.pop %v409
      %v418 = vmul.f32 %v409, %v417
      %vm419 = vcmp.eq.f32.partialorder %v409, inf
      %v420 = vsel %vm419, %v409, %v418
      %vm421 = vcmp.eq.f32.partialorder %v409, 0.0
      %v422 = vand.u32 %v409, 2147483648
      %v423 = vsel %vm421, %v422, %v420
      %v424 = vld [vmem:[%s0] sm:$0xf]
      %v425 = vld [vmem:[%s2] sm:$0xf]
      %427 = vset.pattern.permute.xlu0 0
      %428 = vperm.xlu0 %427, %v424
      %v429 = vpop.permute.xlu0 %428
      %v431 = vlaneseq
      %v432 = vshrl.u32 %v431, 7
      %v433 = vsub.s32 0, %v432
      %v434 = vrot.slane %v279, %v433
      %v435 = vlaneseq
      %v436 = vshrl.u32 %v435, 7
      %v437 = vsub.s32 4, %v436
      %v438 = vrot.slane %v279, %v437
      %v441 = vlaneseq
      %v442 = vshrl.u32 %v441, 7
      %v443 = vsub.s32 0, %v442
      %v444 = vrot.slane %v434, %v443
      %v445 = vlaneseq
      %v446 = vshrl.u32 %v445, 7
      %v447 = vsub.s32 0, %v446
      %v448 = vrot.slane %v438, %v447
      %v449 = vmul.f32 %v429, %v444
      %v450 = vmul.f32 %v429, %v448
      %452 = vset.pattern.permute.xlu0 0
      %453 = vperm.xlu0 %452, %v425
      %v454 = vpop.permute.xlu0 %453
      %v456 = vadd.f32 %v454, %v449
      %v457 = vadd.f32 %v454, %v450
      %458 = vset.pattern.permute.xlu0 1
      %459 = vperm.xlu0 %458, %v424
      %v460 = vpop.permute.xlu0 %459
      %v462 = vlaneseq
      %v463 = vshrl.u32 %v462, 7
      %v464 = vsub.s32 1, %v463
      %v465 = vrot.slane %v279, %v464
      %v466 = vlaneseq
      %v467 = vshrl.u32 %v466, 7
      %v468 = vsub.s32 5, %v467
      %v469 = vrot.slane %v279, %v468
      %v472 = vlaneseq
      %v473 = vshrl.u32 %v472, 7
      %v474 = vsub.s32 1, %v473
      %v475 = vrot.slane %v465, %v474
      %v476 = vlaneseq
      %v477 = vshrl.u32 %v476, 7
      %v478 = vsub.s32 1, %v477
      %v479 = vrot.slane %v469, %v478
      %v480 = vmul.f32 %v460, %v475
      %v481 = vmul.f32 %v460, %v479
      %v482 = vadd.f32 %v456, %v480
      %v483 = vadd.f32 %v457, %v481
      %484 = vset.pattern.permute.xlu0 2
      %485 = vperm.xlu0 %484, %v424
      %v486 = vpop.permute.xlu0 %485
      %v488 = vlaneseq
      %v489 = vshrl.u32 %v488, 7
      %v490 = vsub.s32 2, %v489
      %v491 = vrot.slane %v279, %v490
      %v492 = vlaneseq
      %v493 = vshrl.u32 %v492, 7
      %v494 = vsub.s32 6, %v493
      %v495 = vrot.slane %v279, %v494
      %v498 = vlaneseq
      %v499 = vshrl.u32 %v498, 7
      %v500 = vsub.s32 2, %v499
      %v501 = vrot.slane %v491, %v500
      %v502 = vlaneseq
      %v503 = vshrl.u32 %v502, 7
      %v504 = vsub.s32 2, %v503
      %v505 = vrot.slane %v495, %v504
      %v506 = vmul.f32 %v486, %v501
      %v507 = vmul.f32 %v486, %v505
      %v508 = vadd.f32 %v482, %v506
      %v509 = vadd.f32 %v483, %v507
      %510 = vset.pattern.permute.xlu0 3
      %511 = vperm.xlu0 %510, %v424
      %v512 = vpop.permute.xlu0 %511
      %v514 = vlaneseq
      %v515 = vshrl.u32 %v514, 7
      %v516 = vsub.s32 3, %v515
      %v517 = vrot.slane %v279, %v516
      %v518 = vlaneseq
      %v519 = vshrl.u32 %v518, 7
      %v520 = vsub.s32 7, %v519
      %v521 = vrot.slane %v279, %v520
      %v524 = vlaneseq
      %v525 = vshrl.u32 %v524, 7
      %v526 = vsub.s32 3, %v525
      %v527 = vrot.slane %v517, %v526
      %v528 = vlaneseq
      %v529 = vshrl.u32 %v528, 7
      %v530 = vsub.s32 3, %v529
      %v531 = vrot.slane %v521, %v530
      %v532 = vmul.f32 %v512, %v527
      %v533 = vmul.f32 %v512, %v531
      %v534 = vadd.f32 %v508, %v532
      %v535 = vadd.f32 %v509, %v533
      %v536 = vmax.f32 %v534, 0.0
      %v537 = vmax.f32 %v535, 0.0
      %v538 = vld [vmem:[%s1] sm:$0xf]
      %v539 = vld [vmem:[%s3] sm:$0xf]
      %541 = vset.pattern.permute.xlu0 0
      %542 = vperm.xlu0 %541, %v538
      %v543 = vpop.permute.xlu0 %542
      %v545 = vmul.f32 %v543, %v444
      %v546 = vmul.f32 %v543, %v448
      %548 = vset.pattern.permute.xlu0 0
      %549 = vperm.xlu0 %548, %v539
      %v550 = vpop.permute.xlu0 %549
      %v552 = vadd.f32 %v550, %v545
      %v553 = vadd.f32 %v550, %v546
      %554 = vset.pattern.permute.xlu0 1
      %555 = vperm.xlu0 %554, %v538
      %v556 = vpop.permute.xlu0 %555
      %v558 = vmul.f32 %v556, %v475
      %v559 = vmul.f32 %v556, %v479
      %v560 = vadd.f32 %v552, %v558
      %v561 = vadd.f32 %v553, %v559
      %562 = vset.pattern.permute.xlu0 2
      %563 = vperm.xlu0 %562, %v538
      %v564 = vpop.permute.xlu0 %563
      %v566 = vmul.f32 %v564, %v501
      %v567 = vmul.f32 %v564, %v505
      %v568 = vadd.f32 %v560, %v566
      %v569 = vadd.f32 %v561, %v567
      %570 = vset.pattern.permute.xlu0 3
      %571 = vperm.xlu0 %570, %v538
      %v572 = vpop.permute.xlu0 %571
      %v574 = vmul.f32 %v572, %v527
      %v575 = vmul.f32 %v572, %v531
      %v576 = vadd.f32 %v568, %v574
      %v577 = vadd.f32 %v569, %v575
      %v578 = vmax.f32 %v576, 0.0
      %v579 = vmax.f32 %v577, 0.0
      %v580 = vld [vmem:[%s4] sm:$0xf]
      %v581 = vld [vmem:[%s5] sm:$0xf]
      %583 = vset.pattern.permute.xlu0 0
      %584 = vperm.xlu0 %583, %v581
      %v585 = vpop.permute.xlu0 %584
      %v587 = vmul.f32 %v585, %v416
      %v588 = vmul.f32 %v585, %v423
      %590 = vset.pattern.permute.xlu0 0
      %591 = vperm.xlu0 %590, %v580
      %v592 = vpop.permute.xlu0 %591
      %v594 = vadd.f32 %v592, %v587
      %v595 = vadd.f32 %v592, %v588
      %v596 = vmax.f32 %v536, %v578
      %v597 = vmax.f32 %v537, %v579
      %v598 = vmul.f32 %v594, %v596
      %v599 = vmul.f32 %v595, %v597
      %v600 = vsub.f32 1.0, %v598
      %v601 = vsub.f32 1.0, %v599
      %v604 = vcombine.low %v600, %v601
      %606 = vst [vmem:[%s278] sm:$0xff] %v604
      %p607 = scmp.lt.s32.totalorder %s18, 1
      %s608 = scalar_select %p607, %s18, 1
      %s609 = smul.addr %s608, 2
      %s610 = smul.addr %s609, 4
      %s611 = scalar_lea.vmem %s7, %s610
      // Predicated region
      $region49: #{pmm_forward.3} parent=47 // pred_check
        %p612 = pneg %p188
      $region50: #{pmm_forward.3} parent=47 // pred_check_branch
        %614 = sbr.rel (%p612) target = $region52
      $region51: #{pmm_forward.3} parent=47 // pred_region
        _
      $region52: #{pmm_forward.3} parent=47 // pred_fallthru
        _
    $region48: #{pmm_forward.3} parent=5 // pred_fallthru
      _
    %p615 = scmp.le.s32.totalorder 2, %s13
    // Predicated region
    $region53: #{pmm_forward.3} parent=5 // pred_check
      %p616 = pneg %p615
    $region54: #{pmm_forward.3} parent=5 // pred_check_branch
      %618 = sbr.rel (%p616) target = $region56
    $region55: #{pmm_forward.3} parent=5 // pred_region
      %s619 = ssub.s32 %s13, 2
      // Predicated region
      $region57: #{pmm_forward.3} parent=55 // pred_check
        %p620 = pneg %p194
      $region58: #{pmm_forward.3} parent=55 // pred_check_branch
        %622 = sbr.rel (%p620) target = $region60
      $region59: #{pmm_forward.3} parent=55 // pred_region
        %p623 = scmp.lt.s32.totalorder %s19, 1
        %s624 = scalar_select %p623, %s19, 1
        %s625 = smul.addr %s624, 2
        %s626 = smul.addr %s625, 4
        %s627 = scalar_lea.vmem %s7, %s626
      $region60: #{pmm_forward.3} parent=55 // pred_fallthru
        _
    $region56: #{pmm_forward.3} parent=5 // pred_fallthru
      _
  $region6: #{pmm_forward.3} parent=0 // loop_footer
    %s17 = sadd.s32 1, %s13
  $region7: #{pmm_forward.3} parent=0 // loop_footer_branch
    %12 = sbr.rel target = $region3
  $region8: #{pmm_forward.3} parent=0 // loop_exit
    _

</llo_original>
